<compile_context>
chip_gen: v7x
topology: tpu7x:2x2x1
jax: 0.10.0
libtpu: 0.0.40
codegen_flags: <defaults>
</compile_context>

<pallas_src>
import functools
import math

import jax
import jax.numpy as jnp
from jax.experimental import pallas as pl
from jax.experimental.pallas import tpu as pltpu

# Plain Python float -> lowered as a literal inside the kernel (no captured const).
_MASK_FILL = -1000000000.0  # matches torch masked_fill_(-1e9)


def _sdpa_kernel(q_ref, k_ref, v_ref, mask_ref, o_ref,
                 q_scr, m_scr, l_scr, acc_scr, *,
                 scale, tk, kv_resident, compute_dtype, approx_recip):
    # q_ref: (tq, d_k)            k_ref/v_ref: (tk, d_k) or (seq, d_k) if resident
    # mask_ref: (tq, tk) 1-byte   o_ref: (tq, d_k)
    # scratch: q_scr (tq, d_k) compute_dtype; m/l (tq, 1) f32; acc (tq, d_k) f32
    ki = pl.program_id(3)

    @pl.when(ki == 0)
    def _init():
        # Q block is constant along the kv axis: fold 1/sqrt(d_k) and the
        # (optional) bf16 cast once, outside the kv loop.
        q_scr[...] = (q_ref[...].astype(jnp.float32) * scale).astype(compute_dtype)
        m_scr[...] = jnp.full_like(m_scr, -jnp.inf)
        l_scr[...] = jnp.zeros_like(l_scr)
        acc_scr[...] = jnp.zeros_like(acc_scr)

    if kv_resident:
        # K/V are resident for the whole (b, h); slice the current kv chunk.
        start = pl.multiple_of(ki * tk, tk)
        k = k_ref[pl.ds(start, tk), :]
        v = v_ref[pl.ds(start, tk), :]
    else:
        k = k_ref[...]
        v = v_ref[...]
    k = k.astype(compute_dtype)
    v = v.astype(compute_dtype)

    q = q_scr[...]

    # scores = (Q / sqrt(d_k)) @ K^T without materializing the transpose;
    # MXU accumulates in f32 via preferred_element_type.
    s = jax.lax.dot_general(
        q, k, (((1,), (1,)), ((), ())), preferred_element_type=jnp.float32)

    # masked_fill_(attn_mask, -1e9): exact fill semantics so fully-masked rows
    # behave like torch (uniform softmax over the -1e9 fills).
    mask = mask_ref[...]
    masked = mask if mask.dtype == jnp.bool_ else (mask != 0)
    s = jnp.where(masked, _MASK_FILL, s)

    # Online (flash) softmax update.
    m_prev = m_scr[...]
    m_new = jnp.maximum(m_prev, jnp.max(s, axis=-1, keepdims=True))
    alpha = jnp.exp(m_prev - m_new)            # correction for old accumulators
    p = jnp.exp(s - m_new)                     # (tq, tk) unnormalized probs
    l_scr[...] = alpha * l_scr[...] + jnp.sum(p, axis=-1, keepdims=True)
    acc_scr[...] = alpha * acc_scr[...] + jnp.dot(
        p.astype(compute_dtype), v, preferred_element_type=jnp.float32)
    m_scr[...] = m_new

    @pl.when(ki == pl.num_programs(3) - 1)
    def _finalize():
        # Deferred normalization: one reciprocal per row (EUP when approx),
        # scaling the (tq, d_k) context instead of the (tq, tk) probs.
        inv = pl.reciprocal(l_scr[...], approx=approx_recip)
        o_ref[...] = (acc_scr[...] * inv).astype(o_ref.dtype)


def _pick_tile(seq, target):
    """Largest divisor of seq <= target, preferring multiples of 256 (MXU width
    on v6e/v7x), then 128; otherwise the whole sequence."""
    if seq <= target:
        return seq
    for align in (256, 128):
        t = (target // align) * align
        while t >= align:
            if seq % t == 0:
                return t
            t -= align
    return seq


def scale_dot_product_attention(Q, K, V, attn_mask, d_k, *,
                                tq=None, tk=None,
                                use_bf16_matmul=None,
                                approx_reciprocal=True,
                                kv_resident_budget_bytes=24 * 1024 * 1024):
    """Q, K, V: [b, h, seq, d_k]; attn_mask: [b, h, seq, seq] or [b, 1, seq, seq]
    (nonzero == masked). Returns context [b, h, seq, d_k]."""
    b, h, seq, dk = Q.shape
    assert K.shape == (b, h, seq, dk) and V.shape == (b, h, seq, dk)
    mb, mh, ms0, ms1 = attn_mask.shape
    assert mb == b and ms0 == seq and ms1 == seq and mh in (1, h)

    scale = 1.0 / math.sqrt(d_k)

    if tq is None:
        tq = _pick_tile(seq, 512)
    if tk is None:
        tk = _pick_tile(seq, 512)
    assert seq % tq == 0 and seq % tk == 0

    in_dtype = jnp.dtype(Q.dtype)
    if use_bf16_matmul is None:
        use_bf16_matmul = jnp.issubdtype(in_dtype, jnp.floating)
    compute_dtype = jnp.dtype(jnp.bfloat16) if use_bf16_matmul else in_dtype

    # Keep the mask at 1 byte; only narrow if it arrives wider.
    if attn_mask.dtype in (jnp.dtype(jnp.bool_), jnp.dtype(jnp.int8),
                           jnp.dtype(jnp.uint8)):
        mask = attn_mask
    else:
        # TODO(synk): narrow the mask where it is produced; this astype re-reads
        # and re-writes the full [*, seq, seq] array in HBM.
        mask = attn_mask.astype(jnp.int8)

    # Resident K/V per (b, h) when the double-buffered full-seq blocks fit the
    # budget (sized for v7x's 64 MiB VMEM; v5e/v6e have more headroom).
    itemsize = in_dtype.itemsize
    kv_block_bytes = 2 * 2 * seq * dk * itemsize  # K + V, double-buffered
    kv_resident = kv_block_bytes <= kv_resident_budget_bytes

    q_spec = pl.BlockSpec((None, None, tq, dk), lambda bi, hi, qi, ki: (bi, hi, qi, 0))
    if kv_resident:
        kv_blk = (None, None, seq, dk)
        kv_map = lambda bi, hi, qi, ki: (bi, hi, 0, 0)   # constant -> DMA'd once per (b,h)
    else:
        kv_blk = (None, None, tk, dk)
        kv_map = lambda bi, hi, qi, ki: (bi, hi, ki, 0)
    k_spec = pl.BlockSpec(kv_blk, kv_map)
    v_spec = pl.BlockSpec(kv_blk, kv_map)

    if mh == 1:   # head-broadcast mask: never replicate across heads
        m_map = lambda bi, hi, qi, ki: (bi, 0, qi, ki)
    else:
        m_map = lambda bi, hi, qi, ki: (bi, hi, qi, ki)
    m_spec = pl.BlockSpec((None, None, tq, tk), m_map)

    # TODO(synk): lane-dense output for dk < 128 (block multiple heads per step).
    o_spec = pl.BlockSpec((None, None, tq, dk), lambda bi, hi, qi, ki: (bi, hi, qi, 0))

    # Derive the VMEM budget from the actual footprint (with headroom for the
    # (tq, tk) score/prob working set), capped under v7x's 64 MiB.
    kv_tile = seq if kv_resident else tk
    cbytes = jnp.dtype(compute_dtype).itemsize
    est = (2 * tq * dk * itemsize            # Q, double-buffered
           + 2 * tq * dk * itemsize          # O, double-buffered
           + 2 * 2 * kv_tile * dk * itemsize # K + V
           + 2 * tq * tk * 1                 # mask
           + tq * dk * cbytes                # scaled-Q scratch
           + 2 * tq * 4 + tq * dk * 4        # m, l, acc scratch
           + 4 * tq * tk * 4)                # score/prob spill headroom
    vmem_limit = int(min(60 * 1024 * 1024, max(32 * 1024 * 1024, 2 * est)))

    kernel = functools.partial(
        _sdpa_kernel, scale=scale, tk=tk, kv_resident=kv_resident,
        compute_dtype=compute_dtype, approx_recip=approx_reciprocal)

    return pl.pallas_call(
        kernel,
        out_shape=jax.ShapeDtypeStruct((b, h, seq, dk), Q.dtype),
        grid_spec=pltpu.PrefetchScalarGridSpec(
            num_scalar_prefetch=0,
            grid=(b, h, seq // tq, seq // tk),
            in_specs=[q_spec, k_spec, v_spec, m_spec],
            out_specs=o_spec,
            scratch_shapes=[
                pltpu.VMEM((tq, dk), compute_dtype),   # scaled Q tile
                pltpu.VMEM((tq, 1), jnp.float32),      # running max
                pltpu.VMEM((tq, 1), jnp.float32),      # running sum
                pltpu.VMEM((tq, dk), jnp.float32),     # output accumulator
            ],
        ),
        compiler_params=pltpu.CompilerParams(
            dimension_semantics=("parallel", "parallel", "parallel", "arbitrary"),
            vmem_limit_bytes=vmem_limit,
        ),
    )(Q, K, V, mask)


def _reference(Q, K, V, attn_mask, d_k):
    Qf, Kf, Vf = (x.astype(jnp.float32) for x in (Q, K, V))
    scores = jnp.einsum("bhqd,bhkd->bhqk", Qf, Kf) / jnp.sqrt(jnp.float32(d_k))
    scores = jnp.where(attn_mask != 0, _MASK_FILL, scores)
    attn = jax.nn.softmax(scores, axis=-1)
    return jnp.einsum("bhqk,bhkd->bhqd", attn, Vf)


if __name__ == "__main__":
    key = jax.random.PRNGKey(0)
    k1, k2, k3, k4, k5, k6, k7, k8 = jax.random.split(key, 8)

    # Case 1: tiny shapes from the PyTorch module docstring, exact numerics
    # (f32 MXU path, exact reciprocal). Mask already produced as int8.
    b_z, nums_head, seq, d_k = 2, 4, 8, 32
    Q = jax.random.normal(k1, (b_z, nums_head, seq, d_k), dtype=jnp.float32)
    K = jax.random.normal(k2, (b_z, nums_head, seq, d_k), dtype=jnp.float32)
    V = jax.random.normal(k3, (b_z, nums_head, seq, d_k), dtype=jnp.float32)
    attn_mask = jax.random.bernoulli(
        k4, 0.2, (b_z, nums_head, seq, seq)).astype(jnp.int8)

    out = scale_dot_product_attention(Q, K, V, attn_mask, d_k,
                                      use_bf16_matmul=False,
                                      approx_reciprocal=False)
    out = jax.block_until_ready(out)
    ref = _reference(Q, K, V, attn_mask, d_k)
    assert out.shape == (b_z, nums_head, seq, d_k)
    err = float(jnp.max(jnp.abs(out - ref)))
    assert jnp.allclose(out, ref, atol=2e-2, rtol=2e-2), err

    # Case 2: exercises the tiled flash recurrence (seq > tile), bf16 MXU with
    # f32 accumulation, approx reciprocal, head-broadcast mask, resident K/V.
    b_z, nums_head, seq, d_k = 2, 4, 256, 64
    Q = jax.random.normal(k5, (b_z, nums_head, seq, d_k), dtype=jnp.bfloat16)
    K = jax.random.normal(k6, (b_z, nums_head, seq, d_k), dtype=jnp.bfloat16)
    V = jax.random.normal(k7, (b_z, nums_head, seq, d_k), dtype=jnp.bfloat16)
    attn_mask = jax.random.bernoulli(k8, 0.15, (b_z, 1, seq, seq)).astype(jnp.int8)

    out = scale_dot_product_attention(Q, K, V, attn_mask, d_k, tq=128, tk=128)
    out = jax.block_until_ready(out)
    ref = _reference(Q, K, V, attn_mask, d_k)
    assert out.shape == (b_z, nums_head, seq, d_k)
    err = float(jnp.max(jnp.abs(out.astype(jnp.float32) - ref)))
    assert jnp.allclose(out.astype(jnp.float32), ref, atol=6e-2, rtol=6e-2), err

    print("KERNEL_OK")
</pallas_src>

<mosaic_0001>
module attributes {stable_mosaic.version = 11 : i64} {
  func.func @_sdpa_kernel(%arg0: i32, %arg1: i32, %arg2: i32, %arg3: i32, %arg4: memref<1x1x8x32xf32, #tpu.memory_space<vmem>>, %arg5: memref<1x1x8x32xf32, #tpu.memory_space<vmem>>, %arg6: memref<1x1x8x32xf32, #tpu.memory_space<vmem>>, %arg7: memref<1x1x8x8xi8, #tpu.memory_space<vmem>>, %arg8: memref<1x1x8x32xf32, #tpu.memory_space<vmem>>, %arg9: memref<8x32xf32, #tpu.memory_space<vmem>>, %arg10: memref<8x1xf32, #tpu.memory_space<vmem>>, %arg11: memref<8x1xf32, #tpu.memory_space<vmem>>, %arg12: memref<8x32xf32, #tpu.memory_space<vmem>>) attributes {dimension_semantics = [#tpu.dimension_semantics<parallel>, #tpu.dimension_semantics<parallel>, #tpu.dimension_semantics<parallel>, #tpu.dimension_semantics<arbitrary>], iteration_bounds = array<i64: 2, 4, 1, 1>, scalar_prefetch = 0 : i64, scratch_operands = 4 : i64, tpu.core_type = #tpu.core_type<tc>, window_params = [{transform_indices = @transform_0, window_bounds = array<i64: 1, 1, 8, 32>}, {transform_indices = @transform_1, window_bounds = array<i64: 1, 1, 8, 32>}, {transform_indices = @transform_2, window_bounds = array<i64: 1, 1, 8, 32>}, {transform_indices = @transform_3, window_bounds = array<i64: 1, 1, 8, 8>}, {transform_indices = @transform_4, window_bounds = array<i64: 1, 1, 8, 32>}]} {
    %c0_i32 = arith.constant 0 : i32
    %0 = arith.cmpi eq, %arg3, %c0_i32 : i32
    %1 = arith.extui %0 : i1 to i32
    %c0_i32_0 = arith.constant 0 : i32
    %2 = arith.cmpi ne, %1, %c0_i32_0 : i32
    scf.if %2 {
      %c0_30 = arith.constant 0 : index
      %c0_31 = arith.constant 0 : index
      %c0_32 = arith.constant 0 : index
      %c0_33 = arith.constant 0 : index
      %44 = vector.load %arg4[%c0_30, %c0_31, %c0_32, %c0_33] : memref<1x1x8x32xf32, #tpu.memory_space<vmem>>, vector<1x1x8x32xf32>
      %45 = vector.shape_cast %44 : vector<1x1x8x32xf32> to vector<8x32xf32>
      %cst_34 = arith.constant 0.176776692 : f32
      %46 = vector.broadcast %cst_34 : f32 to vector<8x32xf32>
      %47 = arith.mulf %45, %46 : vector<8x32xf32>
      %c0_35 = arith.constant 0 : index
      %c0_36 = arith.constant 0 : index
      %48 = vector.load %arg9[%c0_35, %c0_36] : memref<8x32xf32, #tpu.memory_space<vmem>>, vector<8x32xf32>
      tpu.vector_store %arg9[%c0_35, %c0_36], %47 {strides = array<i32>} : memref<8x32xf32, #tpu.memory_space<vmem>>, vector<8x32xf32>,
      %cst_37 = arith.constant 0xFF800000 : f32
      %49 = vector.broadcast %cst_37 : f32 to vector<8x1xf32>
      %c0_38 = arith.constant 0 : index
      %c0_39 = arith.constant 0 : index
      %50 = vector.load %arg10[%c0_38, %c0_39] : memref<8x1xf32, #tpu.memory_space<vmem>>, vector<8x1xf32>
      tpu.vector_store %arg10[%c0_38, %c0_39], %49 {strides = array<i32>} : memref<8x1xf32, #tpu.memory_space<vmem>>, vector<8x1xf32>,
      %cst_40 = arith.constant 0.000000e+00 : f32
      %51 = vector.broadcast %cst_40 : f32 to vector<8x1xf32>
      %c0_41 = arith.constant 0 : index
      %c0_42 = arith.constant 0 : index
      %52 = vector.load %arg11[%c0_41, %c0_42] : memref<8x1xf32, #tpu.memory_space<vmem>>, vector<8x1xf32>
      tpu.vector_store %arg11[%c0_41, %c0_42], %51 {strides = array<i32>} : memref<8x1xf32, #tpu.memory_space<vmem>>, vector<8x1xf32>,
      %cst_43 = arith.constant 0.000000e+00 : f32
      %53 = vector.broadcast %cst_43 : f32 to vector<8x32xf32>
      %c0_44 = arith.constant 0 : index
      %c0_45 = arith.constant 0 : index
      %54 = vector.load %arg12[%c0_44, %c0_45] : memref<8x32xf32, #tpu.memory_space<vmem>>, vector<8x32xf32>
      tpu.vector_store %arg12[%c0_44, %c0_45], %53 {strides = array<i32>} : memref<8x32xf32, #tpu.memory_space<vmem>>, vector<8x32xf32>,
    } else {
    }
    %c8_i32 = arith.constant 8 : i32
    %3 = arith.muli %arg3, %c8_i32 : i32
    %4 = tpu.assume_multiple %3, 8 : i32
    %c0 = arith.constant 0 : index
    %c0_1 = arith.constant 0 : index
    %5 = arith.index_cast %4 : i32 to index
    %c0_2 = arith.constant 0 : index
    %6 = vector.load %arg5[%c0, %c0_1, %5, %c0_2] : memref<1x1x8x32xf32, #tpu.memory_space<vmem>>, vector<1x1x8x32xf32>
    %7 = vector.shape_cast %6 : vector<1x1x8x32xf32> to vector<8x32xf32>
    %c0_3 = arith.constant 0 : index
    %c0_4 = arith.constant 0 : index
    %8 = arith.index_cast %4 : i32 to index
    %c0_5 = arith.constant 0 : index
    %9 = vector.load %arg6[%c0_3, %c0_4, %8, %c0_5] : memref<1x1x8x32xf32, #tpu.memory_space<vmem>>, vector<1x1x8x32xf32>
    %10 = vector.shape_cast %9 : vector<1x1x8x32xf32> to vector<8x32xf32>
    %c0_6 = arith.constant 0 : index
    %c0_7 = arith.constant 0 : index
    %11 = vector.load %arg9[%c0_6, %c0_7] : memref<8x32xf32, #tpu.memory_space<vmem>>, vector<8x32xf32>
    %cst = arith.constant dense<0.000000e+00> : vector<8x8xf32>
    %12 = tpu.matmul %11, %7, %cst {dimension_numbers = #tpu.dot_dimension_numbers<[1], [1], [0], [0], [0, 0, 1, 0], [], []>} : vector<8x32xf32>, vector<8x32xf32>, vector<8x8xf32> -> vector<8x8xf32>
    %c0_8 = arith.constant 0 : index
    %c0_9 = arith.constant 0 : index
    %c0_10 = arith.constant 0 : index
    %c0_11 = arith.constant 0 : index
    %13 = vector.load %arg7[%c0_8, %c0_9, %c0_10, %c0_11] : memref<1x1x8x8xi8, #tpu.memory_space<vmem>>, vector<1x1x8x8xi8>
    %14 = vector.shape_cast %13 : vector<1x1x8x8xi8> to vector<8x8xi8>
    %c0_i8 = arith.constant 0 : i8
    %15 = vector.broadcast %c0_i8 : i8 to vector<8x8xi8>
    %16 = arith.cmpi ne, %14, %15 : vector<8x8xi8>
    %cst_12 = arith.constant -1.000000e+09 : f32
    %17 = vector.broadcast %cst_12 : f32 to vector<8x8xf32>
    %18 = arith.select %16, %17, %12 : vector<8x8xi1>, vector<8x8xf32>
    %c0_13 = arith.constant 0 : index
    %c0_14 = arith.constant 0 : index
    %19 = vector.load %arg10[%c0_13, %c0_14] : memref<8x1xf32, #tpu.memory_space<vmem>>, vector<8x1xf32>
    %cst_15 = arith.constant dense<0xFF800000> : vector<8xf32>
    %20 = vector.multi_reduction <maximumf>, %18, %cst_15 [1] : vector<8x8xf32> to vector<8xf32>
    %21 = vector.shape_cast %20 : vector<8xf32> to vector<8x1xf32>
    %22 = arith.maximumf %19, %21 : vector<8x1xf32>
    %23 = arith.subf %19, %22 : vector<8x1xf32>
    %24 = math.exp %23 : vector<8x1xf32>
    %25 = vector.broadcast %22 : vector<8x1xf32> to vector<8x8xf32>
    %26 = arith.subf %18, %25 : vector<8x8xf32>
    %27 = math.exp %26 : vector<8x8xf32>
    %c0_16 = arith.constant 0 : index
    %c0_17 = arith.constant 0 : index
    %28 = vector.load %arg11[%c0_16, %c0_17] : memref<8x1xf32, #tpu.memory_space<vmem>>, vector<8x1xf32>
    %29 = arith.mulf %24, %28 : vector<8x1xf32>
    %cst_18 = arith.constant dense<0.000000e+00> : vector<8xf32>
    %30 = vector.multi_reduction <add>, %27, %cst_18 [1] : vector<8x8xf32> to vector<8xf32>
    %31 = vector.shape_cast %30 : vector<8xf32> to vector<8x1xf32>
    %32 = arith.addf %29, %31 : vector<8x1xf32>
    %c0_19 = arith.constant 0 : index
    %c0_20 = arith.constant 0 : index
    %33 = vector.load %arg11[%c0_19, %c0_20] : memref<8x1xf32, #tpu.memory_space<vmem>>, vector<8x1xf32>
    tpu.vector_store %arg11[%c0_19, %c0_20], %32 {strides = array<i32>} : memref<8x1xf32, #tpu.memory_space<vmem>>, vector<8x1xf32>,
    %c0_21 = arith.constant 0 : index
    %c0_22 = arith.constant 0 : index
    %34 = vector.load %arg12[%c0_21, %c0_22] : memref<8x32xf32, #tpu.memory_space<vmem>>, vector<8x32xf32>
    %35 = vector.broadcast %24 : vector<8x1xf32> to vector<8x32xf32>
    %36 = arith.mulf %35, %34 : vector<8x32xf32>
    %cst_23 = arith.constant dense<0.000000e+00> : vector<8x32xf32>
    %37 = tpu.matmul %27, %10, %cst_23 {dimension_numbers = #tpu.dot_dimension_numbers<[1], [0], [0], [1], [0, 0, 1, 1], [], []>} : vector<8x8xf32>, vector<8x32xf32>, vector<8x32xf32> -> vector<8x32xf32>
    %38 = arith.addf %36, %37 : vector<8x32xf32>
    %c0_24 = arith.constant 0 : index
    %c0_25 = arith.constant 0 : index
    %39 = vector.load %arg12[%c0_24, %c0_25] : memref<8x32xf32, #tpu.memory_space<vmem>>, vector<8x32xf32>
    tpu.vector_store %arg12[%c0_24, %c0_25], %38 {strides = array<i32>} : memref<8x32xf32, #tpu.memory_space<vmem>>, vector<8x32xf32>,
    %c0_26 = arith.constant 0 : index
    %c0_27 = arith.constant 0 : index
    %40 = vector.load %arg10[%c0_26, %c0_27] : memref<8x1xf32, #tpu.memory_space<vmem>>, vector<8x1xf32>
    tpu.vector_store %arg10[%c0_26, %c0_27], %22 {strides = array<i32>} : memref<8x1xf32, #tpu.memory_space<vmem>>, vector<8x1xf32>,
    %c0_i32_28 = arith.constant 0 : i32
    %41 = arith.cmpi eq, %arg3, %c0_i32_28 : i32
    %42 = arith.extui %41 : i1 to i32
    %c0_i32_29 = arith.constant 0 : i32
    %43 = arith.cmpi ne, %42, %c0_i32_29 : i32
    scf.if %43 {
      %c0_30 = arith.constant 0 : index
      %c0_31 = arith.constant 0 : index
      %44 = vector.load %arg11[%c0_30, %c0_31] : memref<8x1xf32, #tpu.memory_space<vmem>>, vector<8x1xf32>
      %45 = tpu.reciprocal %44 : vector<8x1xf32> -> vector<8x1xf32>
      %c0_32 = arith.constant 0 : index
      %c0_33 = arith.constant 0 : index
      %46 = vector.load %arg12[%c0_32, %c0_33] : memref<8x32xf32, #tpu.memory_space<vmem>>, vector<8x32xf32>
      %47 = vector.broadcast %45 : vector<8x1xf32> to vector<8x32xf32>
      %48 = arith.mulf %46, %47 : vector<8x32xf32>
      %c0_34 = arith.constant 0 : index
      %c0_35 = arith.constant 0 : index
      %c0_36 = arith.constant 0 : index
      %c0_37 = arith.constant 0 : index
      %49 = vector.load %arg8[%c0_34, %c0_35, %c0_36, %c0_37] : memref<1x1x8x32xf32, #tpu.memory_space<vmem>>, vector<1x1x8x32xf32>
      %50 = vector.shape_cast %49 : vector<1x1x8x32xf32> to vector<8x32xf32>
      %51 = vector.shape_cast %48 : vector<8x32xf32> to vector<1x1x8x32xf32>
      tpu.vector_store %arg8[%c0_34, %c0_35, %c0_36, %c0_37], %51 {strides = array<i32>} : memref<1x1x8x32xf32, #tpu.memory_space<vmem>>, vector<1x1x8x32xf32>,
    } else {
    }
    return
  }
  func.func @transform_0(%arg0: i32, %arg1: i32, %arg2: i32, %arg3: i32) -> (i32, i32, i32, i32) {
    %c0_i32 = arith.constant 0 : i32
    %c0_i32_0 = arith.constant 0 : i32
    return %arg0, %arg1, %arg2, %c0_i32 : i32, i32, i32, i32
  }
  func.func @transform_1(%arg0: i32, %arg1: i32, %arg2: i32, %arg3: i32) -> (i32, i32, i32, i32) {
    %c0_i32 = arith.constant 0 : i32
    %c0_i32_0 = arith.constant 0 : i32
    %c0_i32_1 = arith.constant 0 : i32
    return %arg0, %arg1, %c0_i32, %c0_i32_0 : i32, i32, i32, i32
  }
  func.func @transform_2(%arg0: i32, %arg1: i32, %arg2: i32, %arg3: i32) -> (i32, i32, i32, i32) {
    %c0_i32 = arith.constant 0 : i32
    %c0_i32_0 = arith.constant 0 : i32
    %c0_i32_1 = arith.constant 0 : i32
    return %arg0, %arg1, %c0_i32, %c0_i32_0 : i32, i32, i32, i32
  }
  func.func @transform_3(%arg0: i32, %arg1: i32, %arg2: i32, %arg3: i32) -> (i32, i32, i32, i32) {
    %c0_i32 = arith.constant 0 : i32
    return %arg0, %arg1, %arg2, %arg3 : i32, i32, i32, i32
  }
  func.func @transform_4(%arg0: i32, %arg1: i32, %arg2: i32, %arg3: i32) -> (i32, i32, i32, i32) {
    %c0_i32 = arith.constant 0 : i32
    %c0_i32_0 = arith.constant 0 : i32
    return %arg0, %arg1, %arg2, %c0_i32 : i32, i32, i32, i32
  }
}

</mosaic_0001>

<llo_original>
// kernel: tpu_custom_call.1
$region0: #{tpu_custom_call.1}
  #allocation0 [shape = 'u32[]', space=smem, size = 0x4, offset = 0x4, fixed_abs, tag = 'smem constant byte address 0x4 - core index']
  #allocation1 [shape = 'u32[144,128]{1,0:T(1,128)}', space=vmem, size = 0x12000, scoped, tag = 'internal scratch']
  #allocation2 [shape = 'f32[8,32]{1,0:T(8,128)}', space=vmem, size = 0x1000, scoped, tag = 'scratch operand']
  #allocation3 [shape = 'f32[8,1]{1,0:T(8,128)}', space=vmem, size = 0x1000, scoped, tag = 'scratch operand']
  #allocation4 [shape = 'f32[8,1]{1,0:T(8,128)}', space=vmem, size = 0x1000, scoped, tag = 'scratch operand']
  #allocation5 [shape = 'f32[8,32]{1,0:T(8,128)}', space=vmem, size = 0x1000, scoped, tag = 'scratch operand']
  %s0 = inlined_call_operand.hbm [shape: f32[2,4,8,32], index: 0, kind: input, shape index: {}]
  %s1 = inlined_call_operand.hbm [shape: f32[2,4,8,32], index: 1, kind: input, shape index: {}]
  %s2 = inlined_call_operand.hbm [shape: f32[2,4,8,32], index: 2, kind: input, shape index: {}]
  %s3 = inlined_call_operand.hbm [shape: s8[2,4,8,8], index: 3, kind: input, shape index: {}]
  %s4 = inlined_call_operand.hbm [shape: f32[2,4,8,32], index: 4, kind: output, shape index: {}]
  %s5 = sld [smem:[#allocation0]]
  $region73: #{tpu_custom_call.1} parent=0
    _
  %s7 = ssub.s32 1, %s5
  %s8 = scalar_select 0, %s7, %s5
  $region1: #{tpu_custom_call.1} parent=0
    #allocation6 [shape = 'u8[8192]{0}', space=vmem, size = 0x2000, scoped, tag = 'input window, operand 0']
    #allocation7 [shape = 's32[2]{0}', space=sflag, size = 0x8, scoped, tag = 'scoped memory for tpu_custom_call.1']
    #allocation8 [shape = 's32[2]{0}', space=sflag, size = 0x8, scoped, tag = 'scoped memory for tpu_custom_call.1']
    #allocation9 [shape = 'u8[8192]{0}', space=vmem, size = 0x2000, scoped, tag = 'input window, operand 1']
    #allocation10 [shape = 's32[2]{0}', space=sflag, size = 0x8, scoped, tag = 'scoped memory for tpu_custom_call.1']
    #allocation11 [shape = 'u8[8192]{0}', space=vmem, size = 0x2000, scoped, tag = 'input window, operand 2']
    #allocation12 [shape = 'u8[2048]{0}', space=vmem, size = 0x800, scoped, tag = 'input window, operand 3']
    #allocation13 [shape = 's32[2]{0}', space=sflag, size = 0x8, scoped, tag = 'scoped memory for tpu_custom_call.1']
    #allocation14 [shape = 'u8[8192]{0}', space=vmem, size = 0x2000, scoped, tag = 'output window, operand 0']
    %9 = vsyncpa [#allocation7], 0
    %s10 = scalar_lea.sflag [#allocation7], 1
    %11 = vsyncpa %s10, 0
    %12 = vsyncpa [#allocation10], 0
    %s13 = scalar_lea.sflag [#allocation10], 1
    %14 = vsyncpa %s13, 0
    %15 = vsyncpa [#allocation13], 0
    %s16 = scalar_lea.sflag [#allocation13], 1
    %17 = vsyncpa %s16, 0
    %18 = vsyncpa [#allocation8], 0
    %s19 = scalar_lea.sflag [#allocation8], 1
    %20 = vsyncpa %s19, 0
    loop: start=0, step=1, limit=10
    $region2: #{tpu_custom_call.1} parent=1 // loop_pre_header
      _
    $region3: #{tpu_custom_call.1} parent=1 // loop_header
      %s22 = sphi 0, %s26
      %p23 = scmp.ge.s32.totalorder %s22, 10
      %s29 = sphi 0, %s55
      %s30 = sphi 0, %s51
      %s31 = sphi 0, %s47
      %s32 = sphi 0, %s43
      %s33 = sphi 0, %s29
      %s34 = sphi 0, %s30
      %s35 = sphi 0, %s31
      %s36 = sphi 0, %s32
      %s37 = sphi 0, %s33
      %s38 = sphi 0, %s34
      %s39 = sphi 0, %s35
      %s40 = sphi 0, %s36
      %s62 = sphi 0, %s64
      %s65 = sphi 0, %s62
      %s66 = sphi 0, %s65
      %s82 = sphi 0, %s66
      %s90 = sphi 0, %s92
      %s93 = sphi 0, %s90
      %s94 = sphi 0, %s93
      %s110 = sphi 0, %s94
      %s118 = sphi 0, %s120
      %s121 = sphi 0, %s118
      %s122 = sphi 0, %s121
      %s138 = sphi 0, %s122
      %s150 = sphi 0, %s152
      %s153 = sphi 0, %s150
      %s154 = sphi 0, %s153
      %s170 = sphi 0, %s154
      %s180 = sphi 0, %s182
      %s183 = sphi 0, %s180
      %s184 = sphi 0, %s183
      %s200 = sphi 0, %s184
    $region4: #{tpu_custom_call.1} parent=1 // loop_header_branch
      %25 = sbr.rel (%p23) target = $region8
    $region5: #{tpu_custom_call.1} parent=1 // loop_body
      %s27 = ssub.s32 %s22, 1
      %s28 = ssub.s32 %s22, 2
      %s41 = sadd.s32 1, %s32
      %p42 = scmp.ge.s32.totalorder %s41, 1
      %s43 = scalar_select %p42, 0, %s41
      %s44 = sadd.s32 1, %s31
      %s45 = scalar_select %p42, %s44, %s31
      %p46 = scmp.ge.s32.totalorder %s45, 1
      %s47 = scalar_select %p46, 0, %s45
      %s48 = sadd.s32 1, %s30
      %s49 = scalar_select %p46, %s48, %s30
      %p50 = scmp.ge.s32.totalorder %s49, 4
      %s51 = scalar_select %p50, 0, %s49
      %s52 = sadd.s32 1, %s29
      %s53 = scalar_select %p50, %s52, %s29
      %p54 = scmp.ge.s32.totalorder %s53, 2
      %s55 = scalar_select %p54, 0, %s53
      %s56 = ssub.s32 %s29, %s55
      %s57 = ssub.s32 %s30, %s51
      %s58 = sor.u32 %s56, %s57
      %s59 = ssub.s32 %s31, %s47
      %s60 = sor.u32 %s58, %s59
      %p61 = scmp.eq.s32.totalorder %s60, 0
      %s63 = sadd.s32 %s62, 1
      %s64 = scalar_select %p61, %s62, %s63
      %p67 = pneg %p61
      %p68 = scmp.eq.s32.totalorder %s22, 7
      %p69 = por %p67, %p68
      %p70 = scmp.ne.s32.totalorder %s62, %s65
      %p71 = scmp.eq.s32.totalorder %s22, 0
      %p72 = por %p70, %p71
      %p73 = scmp.ne.s32.totalorder %s62, %s65
      %p74 = scmp.eq.s32.totalorder %s27, 7
      %p75 = por %p73, %p74
      %p76 = scmp.ne.s32.totalorder %s65, %s66
      %p77 = scmp.eq.s32.totalorder %s27, 0
      %p78 = por %p76, %p77
      %p79 = scmp.ne.s32.totalorder %s65, %s66
      %p80 = scmp.eq.s32.totalorder %s28, 7
      %p81 = por %p79, %p80
      %p83 = scmp.ne.s32.totalorder %s66, %s82
      %p84 = scmp.eq.s32.totalorder %s28, 0
      %p85 = por %p83, %p84
      %s86 = ssub.s32 %s29, %s55
      %s87 = ssub.s32 %s30, %s51
      %s88 = sor.u32 %s86, %s87
      %p89 = scmp.eq.s32.totalorder %s88, 0
      %s91 = sadd.s32 %s90, 1
      %s92 = scalar_select %p89, %s90, %s91
      %p95 = pneg %p89
      %p96 = scmp.eq.s32.totalorder %s22, 7
      %p97 = por %p95, %p96
      %p98 = scmp.ne.s32.totalorder %s90, %s93
      %p99 = scmp.eq.s32.totalorder %s22, 0
      %p100 = por %p98, %p99
      %p101 = scmp.ne.s32.totalorder %s90, %s93
      %p102 = scmp.eq.s32.totalorder %s27, 7
      %p103 = por %p101, %p102
      %p104 = scmp.ne.s32.totalorder %s93, %s94
      %p105 = scmp.eq.s32.totalorder %s27, 0
      %p106 = por %p104, %p105
      %p107 = scmp.ne.s32.totalorder %s93, %s94
      %p108 = scmp.eq.s32.totalorder %s28, 7
      %p109 = por %p107, %p108
      %p111 = scmp.ne.s32.totalorder %s94, %s110
      %p112 = scmp.eq.s32.totalorder %s28, 0
      %p113 = por %p111, %p112
      %s114 = ssub.s32 %s29, %s55
      %s115 = ssub.s32 %s30, %s51
      %s116 = sor.u32 %s114, %s115
      %p117 = scmp.eq.s32.totalorder %s116, 0
      %s119 = sadd.s32 %s118, 1
      %s120 = scalar_select %p117, %s118, %s119
      %p123 = pneg %p117
      %p124 = scmp.eq.s32.totalorder %s22, 7
      %p125 = por %p123, %p124
      %p126 = scmp.ne.s32.totalorder %s118, %s121
      %p127 = scmp.eq.s32.totalorder %s22, 0
      %p128 = por %p126, %p127
      %p129 = scmp.ne.s32.totalorder %s118, %s121
      %p130 = scmp.eq.s32.totalorder %s27, 7
      %p131 = por %p129, %p130
      %p132 = scmp.ne.s32.totalorder %s121, %s122
      %p133 = scmp.eq.s32.totalorder %s27, 0
      %p134 = por %p132, %p133
      %p135 = scmp.ne.s32.totalorder %s121, %s122
      %p136 = scmp.eq.s32.totalorder %s28, 7
      %p137 = por %p135, %p136
      %p139 = scmp.ne.s32.totalorder %s122, %s138
      %p140 = scmp.eq.s32.totalorder %s28, 0
      %p141 = por %p139, %p140
      %s142 = ssub.s32 %s29, %s55
      %s143 = ssub.s32 %s30, %s51
      %s144 = sor.u32 %s142, %s143
      %s145 = ssub.s32 %s31, %s47
      %s146 = sor.u32 %s144, %s145
      %s147 = ssub.s32 %s32, %s43
      %s148 = sor.u32 %s146, %s147
      %p149 = scmp.eq.s32.totalorder %s148, 0
      %s151 = sadd.s32 %s150, 1
      %s152 = scalar_select %p149, %s150, %s151
      %p155 = pneg %p149
      %p156 = scmp.eq.s32.totalorder %s22, 7
      %p157 = por %p155, %p156
      %p158 = scmp.ne.s32.totalorder %s150, %s153
      %p159 = scmp.eq.s32.totalorder %s22, 0
      %p160 = por %p158, %p159
      %p161 = scmp.ne.s32.totalorder %s150, %s153
      %p162 = scmp.eq.s32.totalorder %s27, 7
      %p163 = por %p161, %p162
      %p164 = scmp.ne.s32.totalorder %s153, %s154
      %p165 = scmp.eq.s32.totalorder %s27, 0
      %p166 = por %p164, %p165
      %p167 = scmp.ne.s32.totalorder %s153, %s154
      %p168 = scmp.eq.s32.totalorder %s28, 7
      %p169 = por %p167, %p168
      %p171 = scmp.ne.s32.totalorder %s154, %s170
      %p172 = scmp.eq.s32.totalorder %s28, 0
      %p173 = por %p171, %p172
      %s174 = ssub.s32 %s29, %s55
      %s175 = ssub.s32 %s30, %s51
      %s176 = sor.u32 %s174, %s175
      %s177 = ssub.s32 %s31, %s47
      %s178 = sor.u32 %s176, %s177
      %p179 = scmp.eq.s32.totalorder %s178, 0
      %s181 = sadd.s32 %s180, 1
      %s182 = scalar_select %p179, %s180, %s181
      %p185 = pneg %p179
      %p186 = scmp.eq.s32.totalorder %s22, 7
      %p187 = por %p185, %p186
      %p188 = scmp.ne.s32.totalorder %s180, %s183
      %p189 = scmp.eq.s32.totalorder %s22, 0
      %p190 = por %p188, %p189
      %p191 = scmp.ne.s32.totalorder %s180, %s183
      %p192 = scmp.eq.s32.totalorder %s27, 7
      %p193 = por %p191, %p192
      %p194 = scmp.ne.s32.totalorder %s183, %s184
      %p195 = scmp.eq.s32.totalorder %s27, 0
      %p196 = por %p194, %p195
      %p197 = scmp.ne.s32.totalorder %s183, %s184
      %p198 = scmp.eq.s32.totalorder %s28, 7
      %p199 = por %p197, %p198
      %p201 = scmp.ne.s32.totalorder %s184, %s200
      %p202 = scmp.eq.s32.totalorder %s28, 0
      %p203 = por %p201, %p202
      %p204 = scmp.le.s32.totalorder 1, %s22
      %p205 = scmp.lt.s32.totalorder %s22, 9
      %p206 = pnand %p204, %p205
      %p207 = pneg %p206
      // Predicated region
      $region9: #{tpu_custom_call.1} parent=5 // pred_check
        _
      $region10: #{tpu_custom_call.1} parent=5 // pred_check_branch
        %209 = sbr.rel (%p206) target = $region12
      $region11: #{tpu_custom_call.1} parent=5 // pred_region
        %s210 = ssub.s32 %s22, 1
      $region12: #{tpu_custom_call.1} parent=5 // pred_fallthru
        _
      %p211 = scmp.lt.s32.totalorder %s22, 8
      // Predicated region
      $region13: #{tpu_custom_call.1} parent=5 // pred_check
        %p212 = pneg %p211
      $region14: #{tpu_custom_call.1} parent=5 // pred_check_branch
        %214 = sbr.rel (%p212) target = $region16
      $region15: #{tpu_custom_call.1} parent=5 // pred_region
        // Predicated region
        $region17: #{tpu_custom_call.1} parent=15 // pred_check
          %p215 = pneg %p72
        $region18: #{tpu_custom_call.1} parent=15 // pred_check_branch
          %217 = sbr.rel (%p215) target = $region20
        $region19: #{tpu_custom_call.1} parent=15 // pred_region
          %s218 = sand.u32 %s62, 1
          %s219 = scalar_lea.sflag [#allocation7], %s218
          %s220 = sand.u32 %s62, 1
          %s221 = smul.addr %s220, 8
          %s222 = scalar_lea.vmem [#allocation6], %s221
          %s224 = ssub.s32 128, 128
          %225 = vsyncadd %s219, %s224
          %s226 = sadd.s32 %s31, %s30
          %s227 = smul.addr %s29, 4
          %s228 = sadd.s32 %s226, %s227
          %s229 = smul.addr %s228, 128
          %s230 = scalar_lea.hbm %s0, %s229
          %s232 = sshll.u32 %s222, 4
          %s233 = int_to_ptr.vmem [resolvable:$true] %s232
          %235 = dma.hbm_to_vmem [thread:$0]  %s230, 128, %s233, %s219
        $region20: #{tpu_custom_call.1} parent=15 // pred_fallthru
          _
        // Predicated region
        $region21: #{tpu_custom_call.1} parent=15 // pred_check
          %p236 = pneg %p100
        $region22: #{tpu_custom_call.1} parent=15 // pred_check_branch
          %238 = sbr.rel (%p236) target = $region24
        $region23: #{tpu_custom_call.1} parent=15 // pred_region
          %s239 = sand.u32 %s22, 1
          %s240 = scalar_lea.sflag [#allocation10], %s239
          %s241 = sand.u32 %s90, 1
          %s242 = smul.addr %s241, 8
          %s243 = scalar_lea.vmem [#allocation9], %s242
          %s245 = ssub.s32 128, 128
          %246 = vsyncadd %s240, %s245
          %s247 = smul.addr %s29, 4
          %s248 = sadd.s32 %s30, %s247
          %s249 = smul.addr %s248, 128
          %s250 = scalar_lea.hbm %s1, %s249
          %s252 = sshll.u32 %s243, 4
          %s253 = int_to_ptr.vmem [resolvable:$true] %s252
          %255 = dma.hbm_to_vmem [thread:$0]  %s250, 128, %s253, %s240
        $region24: #{tpu_custom_call.1} parent=15 // pred_fallthru
          _
        // Predicated region
        $region25: #{tpu_custom_call.1} parent=15 // pred_check
          %p256 = pneg %p128
        $region26: #{tpu_custom_call.1} parent=15 // pred_check_branch
          %258 = sbr.rel (%p256) target = $region28
        $region27: #{tpu_custom_call.1} parent=15 // pred_region
          %s259 = sand.u32 %s22, 1
          %s260 = scalar_lea.sflag [#allocation10], %s259
          %s261 = sand.u32 %s118, 1
          %s262 = smul.addr %s261, 8
          %s263 = scalar_lea.vmem [#allocation11], %s262
          %s265 = ssub.s32 128, 128
          %266 = vsyncadd %s260, %s265
          %s267 = smul.addr %s29, 4
          %s268 = sadd.s32 %s30, %s267
          %s269 = smul.addr %s268, 128
          %s270 = scalar_lea.hbm %s2, %s269
          %s272 = sshll.u32 %s263, 4
          %s273 = int_to_ptr.vmem [resolvable:$true] %s272
          %275 = dma.hbm_to_vmem [thread:$0]  %s270, 128, %s273, %s260
        $region28: #{tpu_custom_call.1} parent=15 // pred_fallthru
          _
        // Predicated region
        $region29: #{tpu_custom_call.1} parent=15 // pred_check
          %p276 = pneg %p160
        $region30: #{tpu_custom_call.1} parent=15 // pred_check_branch
          %278 = sbr.rel (%p276) target = $region32
        $region31: #{tpu_custom_call.1} parent=15 // pred_region
          %s279 = sand.u32 %s150, 1
          %s280 = scalar_lea.sflag [#allocation13], %s279
          %s281 = sand.u32 %s150, 1
          %s282 = smul.addr %s281, 2
          %s283 = scalar_lea.vmem [#allocation12], %s282
          %s285 = ssub.s32 32, 32
          %286 = vsyncadd %s280, %s285
          %s287 = sadd.s32 %s32, %s31
          %s288 = sadd.s32 %s287, %s30
          %s289 = smul.addr %s29, 4
          %s290 = sadd.s32 %s288, %s289
          %s291 = smul.addr %s290, 32
          %s292 = scalar_lea.hbm %s3, %s291
          %s294 = sshll.u32 %s283, 4
          %s295 = int_to_ptr.vmem [resolvable:$true] %s294
          %297 = dma.hbm_to_vmem [thread:$0]  %s292, 32, %s295, %s280
        $region32: #{tpu_custom_call.1} parent=15 // pred_fallthru
          _
      $region16: #{tpu_custom_call.1} parent=5 // pred_fallthru
        _
      %p298 = scmp.le.s32.totalorder 1, %s22
      %p299 = scmp.lt.s32.totalorder %s22, 9
      %p300 = pnand %p298, %p299
      %p301 = pneg %p300
      // Predicated region
      $region33: #{tpu_custom_call.1} parent=5 // pred_check
        _
      $region34: #{tpu_custom_call.1} parent=5 // pred_check_branch
        %303 = sbr.rel (%p300) target = $region36
      $region35: #{tpu_custom_call.1} parent=5 // pred_region
        %s304 = ssub.s32 %s22, 1
        %s305 = sand.u32 %s65, 1
        %s306 = scalar_lea.sflag [#allocation7], %s305
        %s307 = sand.u32 %s65, 1
        %s308 = smul.addr %s307, 8
        %s309 = scalar_lea.vmem [#allocation6], %s308
        // Predicated region
        $region37: #{tpu_custom_call.1} parent=35 // pred_check
          %p310 = pneg %p78
        $region38: #{tpu_custom_call.1} parent=35 // pred_check_branch
          %312 = sbr.rel (%p310) target = $region40
        $region39: #{tpu_custom_call.1} parent=35 // pred_region
          %313 = dma.done %s306, 128
        $region40: #{tpu_custom_call.1} parent=35 // pred_fallthru
          _
        %s314 = sand.u32 %s27, 1
        %s315 = scalar_lea.sflag [#allocation10], %s314
        %s316 = sand.u32 %s93, 1
        %s317 = smul.addr %s316, 8
        %s318 = scalar_lea.vmem [#allocation9], %s317
        // Predicated region
        $region41: #{tpu_custom_call.1} parent=35 // pred_check
          %p319 = pneg %p106
        $region42: #{tpu_custom_call.1} parent=35 // pred_check_branch
          %321 = sbr.rel (%p319) target = $region44
        $region43: #{tpu_custom_call.1} parent=35 // pred_region
          %322 = dma.done %s315, 128
        $region44: #{tpu_custom_call.1} parent=35 // pred_fallthru
          _
        %s323 = sand.u32 %s27, 1
        %s324 = scalar_lea.sflag [#allocation10], %s323
        %s325 = sand.u32 %s121, 1
        %s326 = smul.addr %s325, 8
        %s327 = scalar_lea.vmem [#allocation11], %s326
        // Predicated region
        $region45: #{tpu_custom_call.1} parent=35 // pred_check
          %p328 = pneg %p134
        $region46: #{tpu_custom_call.1} parent=35 // pred_check_branch
          %330 = sbr.rel (%p328) target = $region48
        $region47: #{tpu_custom_call.1} parent=35 // pred_region
          %331 = dma.done %s324, 128
        $region48: #{tpu_custom_call.1} parent=35 // pred_fallthru
          _
        %s332 = sand.u32 %s153, 1
        %s333 = scalar_lea.sflag [#allocation13], %s332
        %s334 = sand.u32 %s153, 1
        %s335 = smul.addr %s334, 2
        %s336 = scalar_lea.vmem [#allocation12], %s335
        // Predicated region
        $region49: #{tpu_custom_call.1} parent=35 // pred_check
          %p337 = pneg %p166
        $region50: #{tpu_custom_call.1} parent=35 // pred_check_branch
          %339 = sbr.rel (%p337) target = $region52
        $region51: #{tpu_custom_call.1} parent=35 // pred_region
          %340 = dma.done %s333, 32
        $region52: #{tpu_custom_call.1} parent=35 // pred_fallthru
          _
        %s341 = sand.u32 %s65, 1
        %s342 = scalar_lea.sflag [#allocation7], %s341
        %s343 = sand.u32 %s65, 1
        %s344 = smul.addr %s343, 8
        %s345 = scalar_lea.vmem [#allocation6], %s344
        %p346 = pneg %p78
        %p347 = pneg %p75
        %s348 = sand.u32 %s27, 1
        %s349 = scalar_lea.sflag [#allocation10], %s348
        %s350 = sand.u32 %s93, 1
        %s351 = smul.addr %s350, 8
        %s352 = scalar_lea.vmem [#allocation9], %s351
        %p353 = pneg %p106
        %p354 = pneg %p103
        %s355 = sand.u32 %s27, 1
        %s356 = scalar_lea.sflag [#allocation10], %s355
        %s357 = sand.u32 %s121, 1
        %s358 = smul.addr %s357, 8
        %s359 = scalar_lea.vmem [#allocation11], %s358
        %p360 = pneg %p134
        %p361 = pneg %p131
        %s362 = sand.u32 %s153, 1
        %s363 = scalar_lea.sflag [#allocation13], %s362
        %s364 = sand.u32 %s153, 1
        %s365 = smul.addr %s364, 2
        %s366 = scalar_lea.vmem [#allocation12], %s365
        %p367 = pneg %p166
        %p368 = pneg %p163
        %p369 = pneg %p196
        %p370 = pneg %p193
        %s371 = sand.u32 %s183, 1
        %s372 = scalar_lea.sflag [#allocation8], %s371
        %s373 = sand.u32 %s183, 1
        %s374 = smul.addr %s373, 8
        %s375 = scalar_lea.vmem [#allocation14], %s374
        %p378 = scmp.eq.s32.totalorder %s36, 0
        // Predicated region
        $region53: #{tpu_custom_call.1} parent=35 // pred_check
          %p379 = pneg %p378
        $region54: #{tpu_custom_call.1} parent=35 // pred_check_branch
          %381 = sbr.rel (%p379) target = $region56
        $region55: #{tpu_custom_call.1} parent=35 // pred_region
          %v382 = vld [vmem:[%s309] sm:$0xff]
          %v383 = vmul.f32 %v382, 0.17677669
          %vm384 = vcmask 261120
          %385 = vst.msk [vmem:[#allocation2] sm:$0xff] %vm384, %v383
          %vm386 = vcmask 7168
          %387 = vst.msk [vmem:[#allocation3] sm:$0xff] %vm386, -inf
          %388 = vst.msk [vmem:[#allocation4] sm:$0xff] %vm386, 0.0
          %389 = vst.msk [vmem:[#allocation5] sm:$0xff] %vm384, 0.0
        $region56: #{tpu_custom_call.1} parent=35 // pred_fallthru
          _
        %s390 = smul.u32 %s36, 8
        %s391 = scalar_lea.vmem %s318, %s390 [#allocation9]
        %v392 = vld [vmem:[%s391] sm:$0xff]
        %s393 = scalar_lea.vmem %s327, %s390 [#allocation11]
        %v394 = vld [vmem:[%s393] sm:$0xff]
        %v395 = vld [vmem:[#allocation2] sm:$0xff]
        %vm396 = vcmask 261120
        %v398 = vsel %vm396, %v395, 0
        %v401 = vsel %vm396, %v392, 0
        %403 = vmatprep.subr.mxu0 0.0
        %404 = vmatpush1.xpose.msra.mxu0 %v401
        %405 = vmatprep.subr.mxu0 0.0
        %406 = vmatpush1.xpose.msra.mxu0 0.0
        %407 = vmatprep.subr.mxu0 0.0
        %408 = vmatpush1.xpose.msra.mxu0 0.0
        %409 = vmatprep.subr.mxu0 0.0
        %410 = vmatpush1.xpose.msra.mxu0 0.0
        %411 = vmatprep.subr.mxu0 0.0
        %412 = vmatpush1.xpose.msra.mxu0 0.0
        %413 = vmatprep.subr.mxu0 0.0
        %414 = vmatpush1.xpose.msra.mxu0 0.0
        %415 = vmatprep.subr.mxu0 0.0
        %416 = vmatpush1.xpose.msra.mxu0 0.0
        %417 = vmatprep.subr.mxu0 0.0
        %418 = vmatpush1.xpose.msra.mxu0 0.0
        %419 = vmatprep.subr.mxu0 0.0
        %420 = vmatpush1.xpose.msra.mxu0 0.0
        %421 = vmatprep.subr.mxu0 0.0
        %422 = vmatpush1.xpose.msra.mxu0 0.0
        %423 = vmatprep.subr.mxu0 0.0
        %424 = vmatpush1.xpose.msra.mxu0 0.0
        %425 = vmatprep.subr.mxu0 0.0
        %426 = vmatpush1.xpose.msra.mxu0 0.0
        %427 = vmatprep.subr.mxu0 0.0
        %428 = vmatpush1.xpose.msra.mxu0 0.0
        %429 = vmatprep.subr.mxu0 0.0
        %430 = vmatpush1.xpose.msra.mxu0 0.0
        %431 = vmatprep.subr.mxu0 0.0
        %432 = vmatpush1.xpose.msra.mxu0 0.0
        %433 = vmatprep.subr.mxu0 0.0
        %434 = vmatpush1.xpose.msra.mxu0 0.0
        %435 = vmatprep.subr.mxu0 0.0
        %436 = vmatpush1.xpose.msra.mxu0 0.0
        %437 = vmatprep.subr.mxu0 0.0
        %438 = vmatpush1.xpose.msra.mxu0 0.0
        %439 = vmatprep.subr.mxu0 0.0
        %440 = vmatpush1.xpose.msra.mxu0 0.0
        %441 = vmatprep.subr.mxu0 0.0
        %442 = vmatpush1.xpose.msra.mxu0 0.0
        %443 = vmatprep.subr.mxu0 0.0
        %444 = vmatpush1.xpose.msra.mxu0 0.0
        %445 = vmatprep.subr.mxu0 0.0
        %446 = vmatpush1.xpose.msra.mxu0 0.0
        %447 = vmatprep.subr.mxu0 0.0
        %448 = vmatpush1.xpose.msra.mxu0 0.0
        %449 = vmatprep.subr.mxu0 0.0
        %450 = vmatpush1.xpose.msra.mxu0 0.0
        %451 = vmatprep.subr.mxu0 0.0
        %452 = vmatpush1.xpose.msra.mxu0 0.0
        %453 = vmatprep.subr.mxu0 0.0
        %454 = vmatpush1.xpose.msra.mxu0 0.0
        %455 = vmatprep.subr.mxu0 0.0
        %456 = vmatpush1.xpose.msra.mxu0 0.0
        %457 = vmatprep.subr.mxu0 0.0
        %458 = vmatpush1.xpose.msra.mxu0 0.0
        %459 = vmatprep.subr.mxu0 0.0
        %460 = vmatpush1.xpose.msra.mxu0 0.0
        %461 = vmatprep.subr.mxu0 0.0
        %462 = vmatpush1.xpose.msra.mxu0 0.0
        %463 = vmatprep.subr.mxu0 0.0
        %464 = vmatpush1.xpose.msra.mxu0 0.0
        %465 = vmatprep.subr.mxu0 0.0
        %466 = vmatpush1.xpose.msra.mxu0 0.0
        %467 = vmatprep.mubr.f32.mxu0 0.0
        %468 = vmatmul.mubr.f32.gmra.mrb[0].mxu0 %v398
        %v469 = vpop.f32.mrb[0].mxu0
        %v470 = vadd.f32 0.0, %v469
        %v471 = vpop.f32.mrb[0].mxu0
        %472 = vdwg.mxu0
        %v473 = vld [vmem:[%s336] sm:$0x3]
        %vm474 = vnez %v473
        %v475 = vsel %vm474, 16843009, 0
        %v476 = vunpack.c.0.s8 %v475
        %vm477 = vcmp.ne.s32.totalorder %v476, 0
        %v478 = vsel %vm477, -1e+09, %v470
        %v479 = vld [vmem:[#allocation3] sm:$0xff]
        %vm480 = vcmask 64512
        %v481 = vsel %vm480, %v478, -inf
        %482 = vmax.xlane.f32.xlu0 %v481
        %v483 = vpop.xlane.xlu0 %482
        %v484 = vmax.f32 %v479, %v483
        %v485 = vsub.f32 %v479, %v484
        %v486 = vmul.f32 %v485, 1.442695
        %v487 = vpow.pop %v486
        %489 = vset.pattern.permute.xlu0 0
        %490 = vperm.xlu0 %489, %v484
        %v491 = vpop.permute.xlu0 %490
        %v493 = vsub.f32 %v478, %v491
        %v494 = vmul.f32 %v493, 1.442695
        %v495 = vpow.pop %v494
        %v496 = vld [vmem:[#allocation4] sm:$0xff]
        %v497 = vmul.f32 %v487, %v496
        %v498 = vsel %vm480, %v495, 0.0
        %499 = vadd.xlane.f32.xlu0 %v498
        %v500 = vpop.xlane.xlu0 %499
        %v501 = vadd.f32 %v497, %v500
        %vm502 = vcmask 7168
        %503 = vst.msk [vmem:[#allocation4] sm:$0xff] %vm502, %v501
        %v504 = vld [vmem:[#allocation5] sm:$0xff]
        %506 = vset.pattern.permute.xlu0 0
        %507 = vperm.xlu0 %506, %v487
        %v508 = vpop.permute.xlu0 %507
        %v510 = vmul.f32 %v508, %v504
        %v512 = vsel %vm480, %v495, 0
        %514 = vmatprep.subr.mxu0 0.0
        %515 = vmatpush1.msra.mxu0 %v394
        %516 = vmatprep.subr.mxu0 0.0
        %517 = vmatpush1.msra.mxu0 0.0
        %518 = vmatprep.subr.mxu0 0.0
        %519 = vmatpush1.msra.mxu0 0.0
        %520 = vmatprep.subr.mxu0 0.0
        %521 = vmatpush1.msra.mxu0 0.0
        %522 = vmatprep.subr.mxu0 0.0
        %523 = vmatpush1.msra.mxu0 0.0
        %524 = vmatprep.subr.mxu0 0.0
        %525 = vmatpush1.msra.mxu0 0.0
        %526 = vmatprep.subr.mxu0 0.0
        %527 = vmatpush1.msra.mxu0 0.0
        %528 = vmatprep.subr.mxu0 0.0
        %529 = vmatpush1.msra.mxu0 0.0
        %530 = vmatprep.subr.mxu0 0.0
        %531 = vmatpush1.msra.mxu0 0.0
        %532 = vmatprep.subr.mxu0 0.0
        %533 = vmatpush1.msra.mxu0 0.0
        %534 = vmatprep.subr.mxu0 0.0
        %535 = vmatpush1.msra.mxu0 0.0
        %536 = vmatprep.subr.mxu0 0.0
        %537 = vmatpush1.msra.mxu0 0.0
        %538 = vmatprep.subr.mxu0 0.0
        %539 = vmatpush1.msra.mxu0 0.0
        %540 = vmatprep.subr.mxu0 0.0
        %541 = vmatpush1.msra.mxu0 0.0
        %542 = vmatprep.subr.mxu0 0.0
        %543 = vmatpush1.msra.mxu0 0.0
        %544 = vmatprep.subr.mxu0 0.0
        %545 = vmatpush1.msra.mxu0 0.0
        %546 = vmatprep.subr.mxu0 0.0
        %547 = vmatpush1.msra.mxu0 0.0
        %548 = vmatprep.subr.mxu0 0.0
        %549 = vmatpush1.msra.mxu0 0.0
        %550 = vmatprep.subr.mxu0 0.0
        %551 = vmatpush1.msra.mxu0 0.0
        %552 = vmatprep.subr.mxu0 0.0
        %553 = vmatpush1.msra.mxu0 0.0
        %554 = vmatprep.subr.mxu0 0.0
        %555 = vmatpush1.msra.mxu0 0.0
        %556 = vmatprep.subr.mxu0 0.0
        %557 = vmatpush1.msra.mxu0 0.0
        %558 = vmatprep.subr.mxu0 0.0
        %559 = vmatpush1.msra.mxu0 0.0
        %560 = vmatprep.subr.mxu0 0.0
        %561 = vmatpush1.msra.mxu0 0.0
        %562 = vmatprep.subr.mxu0 0.0
        %563 = vmatpush1.msra.mxu0 0.0
        %564 = vmatprep.subr.mxu0 0.0
        %565 = vmatpush1.msra.mxu0 0.0
        %566 = vmatprep.subr.mxu0 0.0
        %567 = vmatpush1.msra.mxu0 0.0
        %568 = vmatprep.subr.mxu0 0.0
        %569 = vmatpush1.msra.mxu0 0.0
        %570 = vmatprep.subr.mxu0 0.0
        %571 = vmatpush1.msra.mxu0 0.0
        %572 = vmatprep.subr.mxu0 0.0
        %573 = vmatpush1.msra.mxu0 0.0
        %574 = vmatprep.subr.mxu0 0.0
        %575 = vmatpush1.msra.mxu0 0.0
        %576 = vmatprep.subr.mxu0 0.0
        %577 = vmatpush1.msra.mxu0 0.0
        %578 = vmatprep.mubr.f32.mxu0 0.0
        %579 = vmatmul.mubr.f32.gmra.mrb[0].mxu0 %v512
        %v580 = vpop.f32.mrb[0].mxu0
        %v581 = vadd.f32 0.0, %v580
        %v582 = vpop.f32.mrb[0].mxu0
        %583 = vdwg.mxu0
        %v584 = vadd.f32 %v510, %v581
        %585 = vst.msk [vmem:[#allocation5] sm:$0xff] %vm396, %v584
        %586 = vst.msk [vmem:[#allocation3] sm:$0xff] %vm502, %v484
        // Predicated region
        $region57: #{tpu_custom_call.1} parent=35 // pred_check
          %p587 = pneg %p378
        $region58: #{tpu_custom_call.1} parent=35 // pred_check_branch
          %589 = sbr.rel (%p587) target = $region60
        $region59: #{tpu_custom_call.1} parent=35 // pred_region
          %v590 = vld [vmem:[#allocation4] sm:$0xff]
          %v591 = vrcp.pop %v590
          %v592 = vld [vmem:[#allocation5] sm:$0xff]
          %594 = vset.pattern.permute.xlu0 0
          %595 = vperm.xlu0 %594, %v591
          %v596 = vpop.permute.xlu0 %595
          %v598 = vmul.f32 %v592, %v596
          %599 = vst.msk [vmem:[%s375] sm:$0xff] %vm396, %v598
        $region60: #{tpu_custom_call.1} parent=35 // pred_fallthru
          _
        %s600 = sand.u32 %s183, 1
        %s601 = scalar_lea.sflag [#allocation8], %s600
        %s602 = sand.u32 %s183, 1
        %s603 = smul.addr %s602, 8
        %s604 = scalar_lea.vmem [#allocation14], %s603
        // Predicated region
        $region61: #{tpu_custom_call.1} parent=35 // pred_check
          %p605 = pneg %p193
        $region62: #{tpu_custom_call.1} parent=35 // pred_check_branch
          %607 = sbr.rel (%p605) target = $region64
        $region63: #{tpu_custom_call.1} parent=35 // pred_region
          %s609 = ssub.s32 128, 128
          %610 = vsyncadd %s601, %s609
          %s611 = sadd.s32 %s35, %s34
          %s612 = smul.addr %s33, 4
          %s613 = sadd.s32 %s611, %s612
          %s614 = smul.addr %s613, 128
          %s615 = scalar_lea.hbm %s4, %s614
          %s617 = sshll.u32 %s604, 4
          %s618 = int_to_ptr.vmem [resolvable:$true] %s617
          %620 = dma.vmem_to_hbm [thread:$0]  %s618, 128, %s615, %s601
        $region64: #{tpu_custom_call.1} parent=35 // pred_fallthru
          _
      $region36: #{tpu_custom_call.1} parent=5 // pred_fallthru
        _
      %p621 = scmp.le.s32.totalorder 2, %s22
      // Predicated region
      $region65: #{tpu_custom_call.1} parent=5 // pred_check
        %p622 = pneg %p621
      $region66: #{tpu_custom_call.1} parent=5 // pred_check_branch
        %624 = sbr.rel (%p622) target = $region68
      $region67: #{tpu_custom_call.1} parent=5 // pred_region
        %s625 = ssub.s32 %s22, 2
        // Predicated region
        $region69: #{tpu_custom_call.1} parent=67 // pred_check
          %p626 = pneg %p199
        $region70: #{tpu_custom_call.1} parent=67 // pred_check_branch
          %628 = sbr.rel (%p626) target = $region72
        $region71: #{tpu_custom_call.1} parent=67 // pred_region
          %s629 = sand.u32 %s184, 1
          %s630 = scalar_lea.sflag [#allocation8], %s629
          %s631 = sand.u32 %s184, 1
          %s632 = smul.addr %s631, 8
          %s633 = scalar_lea.vmem [#allocation14], %s632
          %634 = dma.done %s630, 128
        $region72: #{tpu_custom_call.1} parent=67 // pred_fallthru
          _
      $region68: #{tpu_custom_call.1} parent=5 // pred_fallthru
        _
    $region6: #{tpu_custom_call.1} parent=1 // loop_footer
      %s26 = sadd.s32 1, %s22
    $region7: #{tpu_custom_call.1} parent=1 // loop_footer_branch
      %21 = sbr.rel target = $region3
    $region8: #{tpu_custom_call.1} parent=1 // loop_exit
      _
    %635 = vsyncpa [#allocation7], 1
    %s636 = scalar_lea.sflag [#allocation7], 1
    %637 = vsyncpa %s636, 1
    %638 = vsyncpa [#allocation10], 1
    %s639 = scalar_lea.sflag [#allocation10], 1
    %640 = vsyncpa %s639, 1
    %641 = vsyncpa [#allocation13], 1
    %s642 = scalar_lea.sflag [#allocation13], 1
    %643 = vsyncpa %s642, 1
    %644 = vsyncpa [#allocation8], 1
    %s645 = scalar_lea.sflag [#allocation8], 1
    %646 = vsyncpa %s645, 1

</llo_original>
